<compile_context>
chip_gen: v7x
topology: tpu7x:2x2x1
jax: 0.10.0
libtpu: 0.0.40
codegen_flags: <defaults>
</compile_context>

<pallas_src>
import functools

import jax
import jax.numpy as jnp
from jax.experimental import pallas as pl
from jax.experimental.pallas import tpu as pltpu

LANES = 128      # vreg lane width
SUBLANES = 8     # vreg sublane count (f32)

_MIB = 1024 * 1024
_RESIDENT_VMEM_BUDGET = 40 * _MIB   # conservative vs. v7x's 64 MiB physical VMEM
_VMEM_LIMIT_CAP = 48 * _MIB


def _round_up(x, m):
    return (x + m - 1) // m * m


def _ceil_div(a, b):
    return (a + b - 1) // b


# --------------------------------------------------------------------------- #
# Primary kernel: weights resident in VMEM, all layers unrolled in-kernel.
# Grid = (num_batch_tiles,); one grid step per batch tile.
# --------------------------------------------------------------------------- #
def _make_resident_kernel(n_layers):
    def kernel(x_ref, w_ref, b_ref, o_ref):
        h = x_ref[...]                                       # (TB, D) bf16
        for l in range(n_layers):                            # static unroll
            y = jnp.dot(h, w_ref[l], preferred_element_type=jnp.float32)
            a = jnp.maximum(y + b_ref[l], 0.0)               # bias + ReLU in f32 (VPU)
            if l + 1 < n_layers:
                h = a.astype(jnp.bfloat16)                   # bf16 inter-layer activation
            else:
                o_ref[...] = a.astype(o_ref.dtype)
    return kernel


# --------------------------------------------------------------------------- #
# Fallback kernel: layer axis on the grid (innermost, "arbitrary"), per-layer
# weights streamed from HBM.  o_ref's block index is constant along the layer
# axis so it stays resident in VMEM and doubles as the activation buffer.
# --------------------------------------------------------------------------- #
def _streamed_mlp_kernel(x_ref, w_ref, b_ref, o_ref):
    layer = pl.program_id(1)

    @pl.when(layer == 0)
    def _():
        o_ref[...] = x_ref[...].astype(jnp.float32)

    y = jnp.dot(o_ref[...].astype(jnp.bfloat16), w_ref[0],
                preferred_element_type=jnp.float32)
    o_ref[...] = jnp.maximum(y + b_ref[0], 0.0)              # (TB, D) + (1, D)


# --------------------------------------------------------------------------- #
# Parameter preparation (done once): pad to lane-dense D, stack, cast to bf16.
# --------------------------------------------------------------------------- #
def prepare_mlp_params(layers, input_dim, n_hidden):
    """Zero-pad each (w, b) to a common (D, D)/(1, D) shape and stack.

    D = round_up(max(input_dim, n_hidden), 128). Zero padding is exact: padded
    input columns hit zero weight rows, padded output columns get zero weight
    columns + zero bias, so relu(0)=0 and they never contaminate real lanes.
    """
    D = _round_up(max(input_dim, n_hidden), LANES)
    ws, bs = [], []
    for (w, b) in layers:
        d_in, d_out = w.shape
        wp = jnp.zeros((D, D), jnp.float32).at[:d_in, :d_out].set(w)
        bp = jnp.zeros((1, D), jnp.float32).at[:, :d_out].set(b.reshape(1, d_out))
        ws.append(wp)
        bs.append(bp)
    w_stack = jnp.stack(ws).astype(jnp.bfloat16)    # (L, D, D) bf16 -> half the HBM DMA
    b_stack = jnp.stack(bs)                         # (L, 1, D) f32
    return w_stack, b_stack, D


# --------------------------------------------------------------------------- #
# Forward wrapper.
# --------------------------------------------------------------------------- #
@functools.partial(jax.jit, static_argnames=("out_dim", "force_streamed"))
def mlp_forward(x, w_stack, b_stack, *, out_dim, force_streamed=False):
    B, in_dim = x.shape
    L, D, _ = w_stack.shape

    # ---- balanced batch tiling -------------------------------------------
    TB_MAX = 512
    num_tiles = _ceil_div(B, TB_MAX)
    if num_tiles == 1 and B >= 256:
        num_tiles = 2            # give v7x's 2nd TensorCore a "parallel" shard
    TB = _round_up(_ceil_div(B, num_tiles), SUBLANES)
    B_pad = num_tiles * TB

    # Stream the input activation in bf16 (halves input DMA; MXU takes bf16).
    x_pad = jnp.zeros((B_pad, D), jnp.bfloat16).at[:B, :in_dim].set(
        x.astype(jnp.bfloat16))

    # ---- path selection (static, shape-based) ------------------------------
    weight_bytes = L * D * D * 2
    bias_bytes = L * D * 4
    tile_elems = TB * D
    resident_footprint = (
        2 * weight_bytes + 2 * bias_bytes           # params (conservatively x2 buffered)
        + 2 * tile_elems * 2 + 2 * tile_elems * 4   # double-buffered in/out tiles
        + 4 * tile_elems * 4                        # in-kernel f32 intermediates headroom
    )
    use_resident = (not force_streamed) and (resident_footprint <= _RESIDENT_VMEM_BUDGET)

    flops = 2 * B_pad * D * D * L

    if use_resident:
        bytes_accessed = (x_pad.size * 2 + weight_bytes + bias_bytes + B_pad * D * 4)
        out_pad = pl.pallas_call(
            _make_resident_kernel(L),
            out_shape=jax.ShapeDtypeStruct((B_pad, D), jnp.float32),
            grid_spec=pltpu.PrefetchScalarGridSpec(
                num_scalar_prefetch=0,
                grid=(num_tiles,),
                in_specs=[
                    pl.BlockSpec((TB, D), lambda i: (i, 0)),          # batch tile (bf16)
                    pl.BlockSpec((L, D, D), lambda i: (0, 0, 0)),     # resident weights
                    pl.BlockSpec((L, 1, D), lambda i: (0, 0, 0)),     # resident biases
                ],
                out_specs=pl.BlockSpec((TB, D), lambda i: (i, 0)),
            ),
            compiler_params=pltpu.CompilerParams(
                dimension_semantics=("parallel",),
                vmem_limit_bytes=int(min(max(32 * _MIB, resident_footprint),
                                         _VMEM_LIMIT_CAP)),
            ),
            cost_estimate=pl.CostEstimate(
                flops=flops, transcendentals=0, bytes_accessed=bytes_accessed),
        )(x_pad, w_stack, b_stack)
    else:
        # Weights are re-streamed per batch tile -> count them per tile.
        bytes_accessed = (x_pad.size * 2
                          + num_tiles * (weight_bytes + bias_bytes)
                          + B_pad * D * 4)
        out_pad = pl.pallas_call(
            _streamed_mlp_kernel,
            out_shape=jax.ShapeDtypeStruct((B_pad, D), jnp.float32),
            grid_spec=pltpu.PrefetchScalarGridSpec(
                num_scalar_prefetch=0,
                grid=(num_tiles, L),
                in_specs=[
                    pl.BlockSpec((TB, D), lambda i, l: (i, 0)),
                    pl.BlockSpec((1, D, D), lambda i, l: (l, 0, 0)),  # streamed per layer
                    pl.BlockSpec((1, 1, D), lambda i, l: (l, 0, 0)),
                ],
                out_specs=pl.BlockSpec((TB, D), lambda i, l: (i, 0)),  # resident over l
            ),
            compiler_params=pltpu.CompilerParams(
                dimension_semantics=("parallel", "arbitrary"),
                vmem_limit_bytes=32 * _MIB,
            ),
            cost_estimate=pl.CostEstimate(
                flops=flops, transcendentals=0, bytes_accessed=bytes_accessed),
        )(x_pad, w_stack, b_stack)

    return out_pad[:B, :out_dim]


# --------------------------------------------------------------------------- #
# Init + references.
# --------------------------------------------------------------------------- #
def init_mlp_params(key, n_layer, input_dim, output_dim, n_hidden):
    """Deterministic init mimicking nn.Linear (uniform +/- 1/sqrt(fan_in))."""
    dims = [(input_dim, n_hidden)] + [(n_hidden, n_hidden)] * (n_layer - 1)
    layers = []
    for (d_in, d_out) in dims:
        key, kw, kb = jax.random.split(key, 3)
        bound = 1.0 / jnp.sqrt(jnp.float32(d_in))
        w = jax.random.uniform(kw, (d_in, d_out), jnp.float32, -bound, bound)
        b = jax.random.uniform(kb, (1, d_out), jnp.float32, -bound, bound)
        layers.append((w, b))
    # output_layer exists in __init__ but is never used in forward.
    key, kw, kb = jax.random.split(key, 3)
    bound = 1.0 / jnp.sqrt(jnp.float32(n_hidden))
    out_w = jax.random.uniform(kw, (n_hidden, output_dim), jnp.float32, -bound, bound)
    out_b = jax.random.uniform(kb, (1, output_dim), jnp.float32, -bound, bound)
    return layers, (out_w, out_b)


def mlp_forward_ref(x, layers, mxu_dtype=jnp.float32):
    h = x
    for (w, b) in layers:
        y = jnp.dot(h.astype(mxu_dtype), w.astype(mxu_dtype),
                    preferred_element_type=jnp.float32)
        h = jnp.maximum(y + b, 0.0)
    return h


if __name__ == "__main__":
    key = jax.random.PRNGKey(0)

    # Small, forward-consistent shapes.
    batch, input_dim, n_hidden, output_dim, n_layer = 8, 16, 32, 8, 3

    key, kx = jax.random.split(key)
    x = jax.random.normal(kx, (batch, input_dim), jnp.float32)

    layers, _unused_output_layer = init_mlp_params(
        key, n_layer, input_dim, output_dim, n_hidden
    )

    w_stack, b_stack, _D = prepare_mlp_params(layers, input_dim, n_hidden)

    ref_bf16 = mlp_forward_ref(x, layers, mxu_dtype=jnp.bfloat16)
    ref_f32 = mlp_forward_ref(x, layers, mxu_dtype=jnp.float32)

    # Primary path: VMEM-resident weight stack, collapsed layer axis.
    out = mlp_forward(x, w_stack, b_stack, out_dim=n_hidden)
    jax.block_until_ready(out)
    assert out.shape == (batch, n_hidden)
    assert jnp.allclose(out, ref_bf16, atol=1e-4, rtol=1e-4), float(
        jnp.max(jnp.abs(out - ref_bf16))
    )
    # PyTorch f32 semantics: loose tolerance accounts for the bf16 MXU cast.
    assert jnp.allclose(out, ref_f32, atol=5e-2, rtol=5e-2), float(
        jnp.max(jnp.abs(out - ref_f32))
    )

    # Fallback path (streamed per-layer weights) exercised once for coverage.
    out_s = mlp_forward(x, w_stack, b_stack, out_dim=n_hidden, force_streamed=True)
    jax.block_until_ready(out_s)
    assert out_s.shape == (batch, n_hidden)
    assert jnp.allclose(out_s, ref_bf16, atol=1e-4, rtol=1e-4), float(
        jnp.max(jnp.abs(out_s - ref_bf16))
    )

    print("KERNEL_OK")
</pallas_src>

<mosaic_0001>
module attributes {stable_mosaic.version = 11 : i64} {
  func.func @kernel(%arg0: i32, %arg1: memref<8x128xbf16, #tpu.memory_space<vmem>>, %arg2: memref<3x128x128xbf16, #tpu.memory_space<vmem>>, %arg3: memref<3x1x128xf32, #tpu.memory_space<vmem>>, %arg4: memref<8x128xf32, #tpu.memory_space<vmem>>) attributes {dimension_semantics = [#tpu.dimension_semantics<parallel>], iteration_bounds = array<i64: 1>, scalar_prefetch = 0 : i64, scratch_operands = 0 : i64, tpu.core_type = #tpu.core_type<tc>, window_params = [{transform_indices = @transform_0, window_bounds = array<i64: 8, 128>}, {pipeline_mode = #tpu.pipeline_mode<synchronous>, transform_indices = @transform_1, window_bounds = array<i64: 3, 128, 128>}, {pipeline_mode = #tpu.pipeline_mode<synchronous>, transform_indices = @transform_2, window_bounds = array<i64: 3, 1, 128>}, {transform_indices = @transform_3, window_bounds = array<i64: 8, 128>}]} {
    %c0 = arith.constant 0 : index
    %c0_0 = arith.constant 0 : index
    %0 = vector.load %arg1[%c0, %c0_0] : memref<8x128xbf16, #tpu.memory_space<vmem>>, vector<8x128xbf16>
    %c0_1 = arith.constant 0 : index
    %c0_2 = arith.constant 0 : index
    %c0_3 = arith.constant 0 : index
    %1 = vector.load %arg2[%c0_1, %c0_2, %c0_3] : memref<3x128x128xbf16, #tpu.memory_space<vmem>>, vector<1x128x128xbf16>
    %2 = vector.shape_cast %1 : vector<1x128x128xbf16> to vector<128x128xbf16>
    %cst = arith.constant dense<0.000000e+00> : vector<8x128xf32>
    %3 = tpu.matmul %0, %2, %cst {dimension_numbers = #tpu.dot_dimension_numbers<[1], [0], [0], [1], [0, 0, 1, 1], [], []>} : vector<8x128xbf16>, vector<128x128xbf16>, vector<8x128xf32> -> vector<8x128xf32>
    %c0_4 = arith.constant 0 : index
    %c0_5 = arith.constant 0 : index
    %c0_6 = arith.constant 0 : index
    %4 = vector.load %arg3[%c0_4, %c0_5, %c0_6] : memref<3x1x128xf32, #tpu.memory_space<vmem>>, vector<1x1x128xf32>
    %5 = vector.shape_cast %4 : vector<1x1x128xf32> to vector<1x128xf32>
    %6 = vector.broadcast %5 : vector<1x128xf32> to vector<8x128xf32>
    %7 = arith.addf %3, %6 : vector<8x128xf32>
    %cst_7 = arith.constant 0.000000e+00 : f32
    %8 = vector.broadcast %cst_7 : f32 to vector<8x128xf32>
    %9 = arith.maximumf %7, %8 : vector<8x128xf32>
    %10 = arith.truncf %9 : vector<8x128xf32> to vector<8x128xbf16>
    %c1 = arith.constant 1 : index
    %c0_8 = arith.constant 0 : index
    %c0_9 = arith.constant 0 : index
    %11 = vector.load %arg2[%c1, %c0_8, %c0_9] : memref<3x128x128xbf16, #tpu.memory_space<vmem>>, vector<1x128x128xbf16>
    %12 = vector.shape_cast %11 : vector<1x128x128xbf16> to vector<128x128xbf16>
    %cst_10 = arith.constant dense<0.000000e+00> : vector<8x128xf32>
    %13 = tpu.matmul %10, %12, %cst_10 {dimension_numbers = #tpu.dot_dimension_numbers<[1], [0], [0], [1], [0, 0, 1, 1], [], []>} : vector<8x128xbf16>, vector<128x128xbf16>, vector<8x128xf32> -> vector<8x128xf32>
    %c1_11 = arith.constant 1 : index
    %c0_12 = arith.constant 0 : index
    %c0_13 = arith.constant 0 : index
    %14 = vector.load %arg3[%c1_11, %c0_12, %c0_13] : memref<3x1x128xf32, #tpu.memory_space<vmem>>, vector<1x1x128xf32>
    %15 = vector.shape_cast %14 : vector<1x1x128xf32> to vector<1x128xf32>
    %16 = vector.broadcast %15 : vector<1x128xf32> to vector<8x128xf32>
    %17 = arith.addf %13, %16 : vector<8x128xf32>
    %cst_14 = arith.constant 0.000000e+00 : f32
    %18 = vector.broadcast %cst_14 : f32 to vector<8x128xf32>
    %19 = arith.maximumf %17, %18 : vector<8x128xf32>
    %20 = arith.truncf %19 : vector<8x128xf32> to vector<8x128xbf16>
    %c2 = arith.constant 2 : index
    %c0_15 = arith.constant 0 : index
    %c0_16 = arith.constant 0 : index
    %21 = vector.load %arg2[%c2, %c0_15, %c0_16] : memref<3x128x128xbf16, #tpu.memory_space<vmem>>, vector<1x128x128xbf16>
    %22 = vector.shape_cast %21 : vector<1x128x128xbf16> to vector<128x128xbf16>
    %cst_17 = arith.constant dense<0.000000e+00> : vector<8x128xf32>
    %23 = tpu.matmul %20, %22, %cst_17 {dimension_numbers = #tpu.dot_dimension_numbers<[1], [0], [0], [1], [0, 0, 1, 1], [], []>} : vector<8x128xbf16>, vector<128x128xbf16>, vector<8x128xf32> -> vector<8x128xf32>
    %c2_18 = arith.constant 2 : index
    %c0_19 = arith.constant 0 : index
    %c0_20 = arith.constant 0 : index
    %24 = vector.load %arg3[%c2_18, %c0_19, %c0_20] : memref<3x1x128xf32, #tpu.memory_space<vmem>>, vector<1x1x128xf32>
    %25 = vector.shape_cast %24 : vector<1x1x128xf32> to vector<1x128xf32>
    %26 = vector.broadcast %25 : vector<1x128xf32> to vector<8x128xf32>
    %27 = arith.addf %23, %26 : vector<8x128xf32>
    %cst_21 = arith.constant 0.000000e+00 : f32
    %28 = vector.broadcast %cst_21 : f32 to vector<8x128xf32>
    %29 = arith.maximumf %27, %28 : vector<8x128xf32>
    %c0_22 = arith.constant 0 : index
    %c0_23 = arith.constant 0 : index
    %30 = vector.load %arg4[%c0_22, %c0_23] : memref<8x128xf32, #tpu.memory_space<vmem>>, vector<8x128xf32>
    tpu.vector_store %arg4[%c0_22, %c0_23], %29 {strides = array<i32>} : memref<8x128xf32, #tpu.memory_space<vmem>>, vector<8x128xf32>,
    return
  }
  func.func @transform_0(%arg0: i32) -> (i32, i32) {
    %c0_i32 = arith.constant 0 : i32
    %c0_i32_0 = arith.constant 0 : i32
    return %arg0, %c0_i32 : i32, i32
  }
  func.func @transform_1(%arg0: i32) -> (i32, i32, i32) {
    %c0_i32 = arith.constant 0 : i32
    %c0_i32_0 = arith.constant 0 : i32
    %c0_i32_1 = arith.constant 0 : i32
    %c0_i32_2 = arith.constant 0 : i32
    return %c0_i32, %c0_i32_0, %c0_i32_1 : i32, i32, i32
  }
  func.func @transform_2(%arg0: i32) -> (i32, i32, i32) {
    %c0_i32 = arith.constant 0 : i32
    %c0_i32_0 = arith.constant 0 : i32
    %c0_i32_1 = arith.constant 0 : i32
    %c0_i32_2 = arith.constant 0 : i32
    return %c0_i32, %c0_i32_0, %c0_i32_1 : i32, i32, i32
  }
  func.func @transform_3(%arg0: i32) -> (i32, i32) {
    %c0_i32 = arith.constant 0 : i32
    %c0_i32_0 = arith.constant 0 : i32
    return %arg0, %c0_i32 : i32, i32
  }
}

</mosaic_0001>

<llo_original>
// kernel: mlp_forward.1
$region0: #{mlp_forward.1}
  #allocation0 [shape = 'u32[]', space=smem, size = 0x4, offset = 0x4, fixed_abs, tag = 'smem constant byte address 0x4 - core index']
  #allocation1 [shape = 'u32[144,128]{1,0:T(1,128)}', space=vmem, size = 0x12000, scoped, tag = 'internal scratch']
  %s0 = inlined_call_operand.vmem [shape: bf16[8,128], index: 0, kind: input, shape index: {}]
  %s1 = inlined_call_operand.hbm [shape: bf16[3,128,128], index: 1, kind: input, shape index: {}]
  %s2 = inlined_call_operand.vmem [shape: f32[3,1,128], index: 2, kind: input, shape index: {}]
  %s3 = inlined_call_operand.hbm [shape: f32[8,128], index: 3, kind: output, shape index: {}]
  %s4 = sld [smem:[#allocation0]]
  $region26: #{mlp_forward.1} parent=0
    _
  %s6 = ssub.s32 1, %s4
  %s7 = scalar_select 0, %s6, %s4
  $region1: #{mlp_forward.1} parent=0
    #allocation2 [shape = 'u8[98304]{0}', space=vmem, size = 0x18000, scoped, tag = 'input window, operand 1, single buffered']
    #allocation3 [shape = 's32[1]{0}', space=sflag, size = 0x4, scoped, tag = 'scoped memory for mlp_forward.1']
    #allocation4 [shape = 's32[1]{0}', space=sflag, size = 0x4, scoped, tag = 'scoped memory for mlp_forward.1']
    #allocation5 [shape = 'u8[4096]{0}', space=vmem, size = 0x1000, scoped, tag = 'output window, operand 0, single buffered']
    %8 = vsyncpa [#allocation3], 0
    %9 = vsyncpa [#allocation4], 0
    // Predicated region
    $region2: #{mlp_forward.1} parent=1 // pred_check
      _
    $region3: #{mlp_forward.1} parent=1 // pred_check_branch
      %11 = sbr.rel (0) target = $region5
    $region4: #{mlp_forward.1} parent=1 // pred_region
      _
    $region5: #{mlp_forward.1} parent=1 // pred_fallthru
      _
    // Predicated region
    $region6: #{mlp_forward.1} parent=1 // pred_check
      _
    $region7: #{mlp_forward.1} parent=1 // pred_check_branch
      %13 = sbr.rel (0) target = $region9
    $region8: #{mlp_forward.1} parent=1 // pred_region
      %s15 = ssub.s32 3072, 3072
      %16 = vsyncadd [#allocation3], %s15
      %s17 = sshll.u32 [#allocation2], 4
      %s18 = int_to_ptr.vmem [resolvable:$true] %s17
      %23 = dma.hbm_to_vmem [thread:$0]  %s1, 3072, %s18, [#allocation3], 64, 64, 4
    $region9: #{mlp_forward.1} parent=1 // pred_fallthru
      _
    // Predicated region
    $region10: #{mlp_forward.1} parent=1 // pred_check
      _
    $region11: #{mlp_forward.1} parent=1 // pred_check_branch
      %25 = sbr.rel (0) target = $region13
    $region12: #{mlp_forward.1} parent=1 // pred_region
      _
    $region13: #{mlp_forward.1} parent=1 // pred_fallthru
      _
    // Predicated region
    $region14: #{mlp_forward.1} parent=1 // pred_check
      _
    $region15: #{mlp_forward.1} parent=1 // pred_check_branch
      %27 = sbr.rel (0) target = $region17
    $region16: #{mlp_forward.1} parent=1 // pred_region
      %28 = dma.done [#allocation3], 3072
    $region17: #{mlp_forward.1} parent=1 // pred_fallthru
      _
    %v30 = vld [vmem:[%s0] sm:$0xf]
    %v31 = vld [vmem:[#allocation2] sm:$0xf]
    %v32 = vld [vmem:[#allocation2 + $0x4] sm:$0xf]
    %v33 = vld [vmem:[#allocation2 + $0x8] sm:$0xf]
    %v34 = vld [vmem:[#allocation2 + $0xc] sm:$0xf]
    %v35 = vld [vmem:[#allocation2 + $0x10] sm:$0xf]
    %v36 = vld [vmem:[#allocation2 + $0x14] sm:$0xf]
    %v37 = vld [vmem:[#allocation2 + $0x18] sm:$0xf]
    %v38 = vld [vmem:[#allocation2 + $0x1c] sm:$0xf]
    %v39 = vld [vmem:[#allocation2 + $0x20] sm:$0xf]
    %v40 = vld [vmem:[#allocation2 + $0x24] sm:$0xf]
    %v41 = vld [vmem:[#allocation2 + $0x28] sm:$0xf]
    %v42 = vld [vmem:[#allocation2 + $0x2c] sm:$0xf]
    %v43 = vld [vmem:[#allocation2 + $0x30] sm:$0xf]
    %v44 = vld [vmem:[#allocation2 + $0x34] sm:$0xf]
    %v45 = vld [vmem:[#allocation2 + $0x38] sm:$0xf]
    %v46 = vld [vmem:[#allocation2 + $0x3c] sm:$0xf]
    %v47 = vld [vmem:[%s2] sm:$0x1]
    %v49 = vlaneseq
    %v50 = vshrl.u32 %v49, 7
    %v51 = vsub.s32 0, %v50
    %v52 = vrot.slane %v47, %v51
    %v70 = vunpack.c.l.b16 %v31
    %v71 = vunpack.c.l.b16 %v32
    %v72 = vunpack.c.l.b16 %v33
    %v73 = vunpack.c.l.b16 %v34
    %v74 = vunpack.c.l.b16 %v35
    %v75 = vunpack.c.l.b16 %v36
    %v76 = vunpack.c.l.b16 %v37
    %v77 = vunpack.c.l.b16 %v38
    %v78 = vunpack.c.l.b16 %v39
    %v79 = vunpack.c.l.b16 %v40
    %v80 = vunpack.c.l.b16 %v41
    %v81 = vunpack.c.l.b16 %v42
    %v82 = vunpack.c.l.b16 %v43
    %v83 = vunpack.c.l.b16 %v44
    %v84 = vunpack.c.l.b16 %v45
    %v85 = vunpack.c.l.b16 %v46
    %v86 = vpack.c.b16 %v71, %v70
    %v87 = vpack.c.b16 %v73, %v72
    %v88 = vpack.c.b16 %v75, %v74
    %v89 = vpack.c.b16 %v77, %v76
    %v90 = vpack.c.b16 %v79, %v78
    %v91 = vpack.c.b16 %v81, %v80
    %v92 = vpack.c.b16 %v83, %v82
    %v93 = vpack.c.b16 %v85, %v84
    %102 = vmatprep.subr.bf16.mxu0 0
    %103 = vmatpush1.bf16.msra.mxu0 %v86
    %104 = vmatprep.subr.bf16.mxu0 0
    %105 = vmatpush1.bf16.msra.mxu0 %v87
    %106 = vmatprep.subr.bf16.mxu0 0
    %107 = vmatpush1.bf16.msra.mxu0 %v88
    %108 = vmatprep.subr.bf16.mxu0 0
    %109 = vmatpush1.bf16.msra.mxu0 %v89
    %110 = vmatprep.subr.bf16.mxu0 0
    %111 = vmatpush1.bf16.msra.mxu0 %v90
    %112 = vmatprep.subr.bf16.mxu0 0
    %113 = vmatpush1.bf16.msra.mxu0 %v91
    %114 = vmatprep.subr.bf16.mxu0 0
    %115 = vmatpush1.bf16.msra.mxu0 %v92
    %116 = vmatprep.subr.bf16.mxu0 0
    %117 = vmatpush1.bf16.msra.mxu0 %v93
    %118 = vmatprep.subr.bf16.mxu0 0
    %119 = vmatpush1.bf16.msra.mxu0 0
    %120 = vmatprep.subr.bf16.mxu0 0
    %121 = vmatpush1.bf16.msra.mxu0 0
    %122 = vmatprep.subr.bf16.mxu0 0
    %123 = vmatpush1.bf16.msra.mxu0 0
    %124 = vmatprep.subr.bf16.mxu0 0
    %125 = vmatpush1.bf16.msra.mxu0 0
    %126 = vmatprep.subr.bf16.mxu0 0
    %127 = vmatpush1.bf16.msra.mxu0 0
    %128 = vmatprep.subr.bf16.mxu0 0
    %129 = vmatpush1.bf16.msra.mxu0 0
    %130 = vmatprep.subr.bf16.mxu0 0
    %131 = vmatpush1.bf16.msra.mxu0 0
    %132 = vmatprep.subr.bf16.mxu0 0
    %133 = vmatpush1.bf16.msra.mxu0 0
    %134 = vmatprep.mubr.bf16.mxu0 0
    %135 = vmatmul.mubr.bf16.gmra.mrb[0].mxu0 %v30
    %v136 = vpop.f32.mrb[0].mxu0
    %v137 = vadd.f32 %v52, %v136
    %v138 = vpop.f32.mrb[0].mxu0
    %v139 = vpop.f32.mrb[0].mxu0
    %v140 = vpop.f32.mrb[0].mxu0
    %141 = vdwg.mxu0
    %v142 = vmax.f32 %v137, 0.0
    %v143 = vpack.c.bf16 %v142, %v142
    %s144 = scalar_lea.vmem [#allocation2], 64
    %v145 = vld [vmem:[%s144] sm:$0xf]
    %v146 = vld [vmem:[%s144 + $0x4] sm:$0xf]
    %v147 = vld [vmem:[%s144 + $0x8] sm:$0xf]
    %v148 = vld [vmem:[%s144 + $0xc] sm:$0xf]
    %v149 = vld [vmem:[%s144 + $0x10] sm:$0xf]
    %v150 = vld [vmem:[%s144 + $0x14] sm:$0xf]
    %v151 = vld [vmem:[%s144 + $0x18] sm:$0xf]
    %v152 = vld [vmem:[%s144 + $0x1c] sm:$0xf]
    %v153 = vld [vmem:[%s144 + $0x20] sm:$0xf]
    %v154 = vld [vmem:[%s144 + $0x24] sm:$0xf]
    %v155 = vld [vmem:[%s144 + $0x28] sm:$0xf]
    %v156 = vld [vmem:[%s144 + $0x2c] sm:$0xf]
    %v157 = vld [vmem:[%s144 + $0x30] sm:$0xf]
    %v158 = vld [vmem:[%s144 + $0x34] sm:$0xf]
    %v159 = vld [vmem:[%s144 + $0x38] sm:$0xf]
    %v160 = vld [vmem:[%s144 + $0x3c] sm:$0xf]
    %s161 = scalar_lea.vmem %s2, 1
    %v162 = vld [vmem:[%s161] sm:$0x1]
    %v164 = vlaneseq
    %v165 = vshrl.u32 %v164, 7
    %v166 = vsub.s32 0, %v165
    %v167 = vrot.slane %v162, %v166
    %v185 = vunpack.c.l.b16 %v145
    %v186 = vunpack.c.l.b16 %v146
    %v187 = vunpack.c.l.b16 %v147
    %v188 = vunpack.c.l.b16 %v148
    %v189 = vunpack.c.l.b16 %v149
    %v190 = vunpack.c.l.b16 %v150
    %v191 = vunpack.c.l.b16 %v151
    %v192 = vunpack.c.l.b16 %v152
    %v193 = vunpack.c.l.b16 %v153
    %v194 = vunpack.c.l.b16 %v154
    %v195 = vunpack.c.l.b16 %v155
    %v196 = vunpack.c.l.b16 %v156
    %v197 = vunpack.c.l.b16 %v157
    %v198 = vunpack.c.l.b16 %v158
    %v199 = vunpack.c.l.b16 %v159
    %v200 = vunpack.c.l.b16 %v160
    %v201 = vpack.c.b16 %v186, %v185
    %v202 = vpack.c.b16 %v188, %v187
    %v203 = vpack.c.b16 %v190, %v189
    %v204 = vpack.c.b16 %v192, %v191
    %v205 = vpack.c.b16 %v194, %v193
    %v206 = vpack.c.b16 %v196, %v195
    %v207 = vpack.c.b16 %v198, %v197
    %v208 = vpack.c.b16 %v200, %v199
    %217 = vmatprep.subr.bf16.mxu0 0
    %218 = vmatpush1.bf16.msra.mxu0 %v201
    %219 = vmatprep.subr.bf16.mxu0 0
    %220 = vmatpush1.bf16.msra.mxu0 %v202
    %221 = vmatprep.subr.bf16.mxu0 0
    %222 = vmatpush1.bf16.msra.mxu0 %v203
    %223 = vmatprep.subr.bf16.mxu0 0
    %224 = vmatpush1.bf16.msra.mxu0 %v204
    %225 = vmatprep.subr.bf16.mxu0 0
    %226 = vmatpush1.bf16.msra.mxu0 %v205
    %227 = vmatprep.subr.bf16.mxu0 0
    %228 = vmatpush1.bf16.msra.mxu0 %v206
    %229 = vmatprep.subr.bf16.mxu0 0
    %230 = vmatpush1.bf16.msra.mxu0 %v207
    %231 = vmatprep.subr.bf16.mxu0 0
    %232 = vmatpush1.bf16.msra.mxu0 %v208
    %233 = vmatprep.subr.bf16.mxu0 0
    %234 = vmatpush1.bf16.msra.mxu0 0
    %235 = vmatprep.subr.bf16.mxu0 0
    %236 = vmatpush1.bf16.msra.mxu0 0
    %237 = vmatprep.subr.bf16.mxu0 0
    %238 = vmatpush1.bf16.msra.mxu0 0
    %239 = vmatprep.subr.bf16.mxu0 0
    %240 = vmatpush1.bf16.msra.mxu0 0
    %241 = vmatprep.subr.bf16.mxu0 0
    %242 = vmatpush1.bf16.msra.mxu0 0
    %243 = vmatprep.subr.bf16.mxu0 0
    %244 = vmatpush1.bf16.msra.mxu0 0
    %245 = vmatprep.subr.bf16.mxu0 0
    %246 = vmatpush1.bf16.msra.mxu0 0
    %247 = vmatprep.subr.bf16.mxu0 0
    %248 = vmatpush1.bf16.msra.mxu0 0
    %249 = vmatprep.mubr.bf16.mxu0 0
    %250 = vmatmul.mubr.bf16.gmra.mrb[0].mxu0 %v143
    %v251 = vpop.f32.mrb[0].mxu0
    %v252 = vadd.f32 %v167, %v251
    %v253 = vpop.f32.mrb[0].mxu0
    %v254 = vpop.f32.mrb[0].mxu0
    %v255 = vpop.f32.mrb[0].mxu0
    %256 = vdwg.mxu0
    %v257 = vmax.f32 %v252, 0.0
    %v258 = vpack.c.bf16 %v257, %v257
    %s259 = scalar_lea.vmem [#allocation2], 128
    %v260 = vld [vmem:[%s259] sm:$0xf]
    %v261 = vld [vmem:[%s259 + $0x4] sm:$0xf]
    %v262 = vld [vmem:[%s259 + $0x8] sm:$0xf]
    %v263 = vld [vmem:[%s259 + $0xc] sm:$0xf]
    %v264 = vld [vmem:[%s259 + $0x10] sm:$0xf]
    %v265 = vld [vmem:[%s259 + $0x14] sm:$0xf]
    %v266 = vld [vmem:[%s259 + $0x18] sm:$0xf]
    %v267 = vld [vmem:[%s259 + $0x1c] sm:$0xf]
    %v268 = vld [vmem:[%s259 + $0x20] sm:$0xf]
    %v269 = vld [vmem:[%s259 + $0x24] sm:$0xf]
    %v270 = vld [vmem:[%s259 + $0x28] sm:$0xf]
    %v271 = vld [vmem:[%s259 + $0x2c] sm:$0xf]
    %v272 = vld [vmem:[%s259 + $0x30] sm:$0xf]
    %v273 = vld [vmem:[%s259 + $0x34] sm:$0xf]
    %v274 = vld [vmem:[%s259 + $0x38] sm:$0xf]
    %v275 = vld [vmem:[%s259 + $0x3c] sm:$0xf]
    %s276 = scalar_lea.vmem %s2, 2
    %v277 = vld [vmem:[%s276] sm:$0x1]
    %v279 = vlaneseq
    %v280 = vshrl.u32 %v279, 7
    %v281 = vsub.s32 0, %v280
    %v282 = vrot.slane %v277, %v281
    %v300 = vunpack.c.l.b16 %v260
    %v301 = vunpack.c.l.b16 %v261
    %v302 = vunpack.c.l.b16 %v262
    %v303 = vunpack.c.l.b16 %v263
    %v304 = vunpack.c.l.b16 %v264
    %v305 = vunpack.c.l.b16 %v265
    %v306 = vunpack.c.l.b16 %v266
    %v307 = vunpack.c.l.b16 %v267
    %v308 = vunpack.c.l.b16 %v268
    %v309 = vunpack.c.l.b16 %v269
    %v310 = vunpack.c.l.b16 %v270
    %v311 = vunpack.c.l.b16 %v271
    %v312 = vunpack.c.l.b16 %v272
    %v313 = vunpack.c.l.b16 %v273
    %v314 = vunpack.c.l.b16 %v274
    %v315 = vunpack.c.l.b16 %v275
    %v316 = vpack.c.b16 %v301, %v300
    %v317 = vpack.c.b16 %v303, %v302
    %v318 = vpack.c.b16 %v305, %v304
    %v319 = vpack.c.b16 %v307, %v306
    %v320 = vpack.c.b16 %v309, %v308
    %v321 = vpack.c.b16 %v311, %v310
    %v322 = vpack.c.b16 %v313, %v312
    %v323 = vpack.c.b16 %v315, %v314
    %332 = vmatprep.subr.bf16.mxu0 0
    %333 = vmatpush1.bf16.msra.mxu0 %v316
    %334 = vmatprep.subr.bf16.mxu0 0
    %335 = vmatpush1.bf16.msra.mxu0 %v317
    %336 = vmatprep.subr.bf16.mxu0 0
    %337 = vmatpush1.bf16.msra.mxu0 %v318
    %338 = vmatprep.subr.bf16.mxu0 0
    %339 = vmatpush1.bf16.msra.mxu0 %v319
    %340 = vmatprep.subr.bf16.mxu0 0
    %341 = vmatpush1.bf16.msra.mxu0 %v320
    %342 = vmatprep.subr.bf16.mxu0 0
    %343 = vmatpush1.bf16.msra.mxu0 %v321
    %344 = vmatprep.subr.bf16.mxu0 0
    %345 = vmatpush1.bf16.msra.mxu0 %v322
    %346 = vmatprep.subr.bf16.mxu0 0
    %347 = vmatpush1.bf16.msra.mxu0 %v323
    %348 = vmatprep.subr.bf16.mxu0 0
    %349 = vmatpush1.bf16.msra.mxu0 0
    %350 = vmatprep.subr.bf16.mxu0 0
    %351 = vmatpush1.bf16.msra.mxu0 0
    %352 = vmatprep.subr.bf16.mxu0 0
    %353 = vmatpush1.bf16.msra.mxu0 0
    %354 = vmatprep.subr.bf16.mxu0 0
    %355 = vmatpush1.bf16.msra.mxu0 0
    %356 = vmatprep.subr.bf16.mxu0 0
    %357 = vmatpush1.bf16.msra.mxu0 0
    %358 = vmatprep.subr.bf16.mxu0 0
    %359 = vmatpush1.bf16.msra.mxu0 0
    %360 = vmatprep.subr.bf16.mxu0 0
    %361 = vmatpush1.bf16.msra.mxu0 0
    %362 = vmatprep.subr.bf16.mxu0 0
    %363 = vmatpush1.bf16.msra.mxu0 0
    %364 = vmatprep.mubr.bf16.mxu0 0
    %365 = vmatmul.mubr.bf16.gmra.mrb[0].mxu0 %v258
    %v366 = vpop.f32.mrb[0].mxu0
    %v367 = vadd.f32 %v282, %v366
    %v368 = vpop.f32.mrb[0].mxu0
    %v369 = vpop.f32.mrb[0].mxu0
    %v370 = vpop.f32.mrb[0].mxu0
    %371 = vdwg.mxu0
    %v372 = vmax.f32 %v367, 0.0
    %373 = vst [vmem:[#allocation5] sm:$0xff] %v372
    // Predicated region
    $region18: #{mlp_forward.1} parent=1 // pred_check
      _
    $region19: #{mlp_forward.1} parent=1 // pred_check_branch
      %375 = sbr.rel (0) target = $region21
    $region20: #{mlp_forward.1} parent=1 // pred_region
      %s377 = ssub.s32 128, 128
      %378 = vsyncadd [#allocation4], %s377
      %s380 = sshll.u32 [#allocation5], 4
      %s381 = int_to_ptr.vmem [resolvable:$true] %s380
      %383 = dma.vmem_to_hbm [thread:$0]  %s381, 128, %s3, [#allocation4]
    $region21: #{mlp_forward.1} parent=1 // pred_fallthru
      _
    // Predicated region
    $region22: #{mlp_forward.1} parent=1 // pred_check
      _
    $region23: #{mlp_forward.1} parent=1 // pred_check_branch
      %385 = sbr.rel (0) target = $region25
    $region24: #{mlp_forward.1} parent=1 // pred_region
      %386 = dma.done [#allocation4], 128
    $region25: #{mlp_forward.1} parent=1 // pred_fallthru
      _
    %387 = vsyncpa [#allocation3], 1
    %388 = vsyncpa [#allocation4], 1

</llo_original>
